<compile_context>
chip_gen: v7x
topology: tpu7x:2x2x1
jax: 0.10.0
libtpu: 0.0.40
codegen_flags: <defaults>
</compile_context>

<pallas_src>
import functools

import jax
import jax.numpy as jnp
from jax.experimental import pallas as pl
from jax.experimental.pallas import tpu as pltpu


_LANE = 128
# Streamed-tile VMEM budget (double-buffered inputs); stays under v5e's 16 MiB scoped
# default with headroom, and is tiny relative to v6e (128 MiB) / v7x (64 MiB) VMEM.
_STREAM_VMEM_BUDGET_BYTES = 12 * 1024 * 1024
# Explicit scoped-VMEM limit: 32 MiB is legal on every generation (v7x physical is
# 64 MiB — keep this <= ~48 MiB there; v5e/v6e are 128 MiB parts).
_VMEM_LIMIT_BYTES = 32 * 1024 * 1024


def _round_up(x, m):
    return -(-x // m) * m


def _default_num_k_splits():
    """2 on chips with >1 TensorCore per device (v7x, v4/v5p megacore), else 1.

    On 1-TC chips a single K-reduction axis keeps the tiny epilogue fused inside
    the kernel; on multi-TC chips splitting the weight stream across cores is
    worth up to ~2x because the kernel is weight-bandwidth bound.
    """
    try:
        kind = jax.devices()[0].device_kind.lower()
    except Exception:
        return 1
    return 2 if any(tag in kind for tag in ("v7", "7x", "v4", "v5p")) else 1


def _plan_k_tiling(d_in, feat, num_k_splits, batch_hint, streamed_budget_bytes):
    """Pick (tk, nk_total, d_in_padded).

    tk is a multiple of 128 sized so the streamed (double-buffered) tiles fit the
    VMEM budget; prefer a tk that divides d_in exactly (no padding) with >= 2 grid
    steps (so weight DMA overlaps MXU work) and nk divisible by the core-split count.
    """
    splits = max(1, int(num_k_splits))
    # Streamed VMEM bytes per unit of tk:
    #   wab tile : 2 buffers x feat lanes x 2 B (bf16)
    #   xR / xD  : 2 buffers x batch sublanes x 4 B (f32) each
    bytes_per_k = 2 * feat * 2 + 2 * 2 * batch_hint * 4
    tk_cap = max(_LANE, (streamed_budget_bytes // bytes_per_k) // _LANE * _LANE)

    best_pipelined = None   # largest divisor with nk >= max(2, splits)
    best_any = None         # largest divisor at all (single-step fallback, small d_in)
    if d_in % _LANE == 0:
        t = min(tk_cap, d_in)
        while t >= _LANE:
            if d_in % t == 0:
                nk = d_in // t
                if nk % splits == 0:
                    if best_any is None:
                        best_any = t
                    if nk >= max(2, splits):
                        best_pipelined = t
                        break
            t -= _LANE
    tk = best_pipelined if best_pipelined is not None else best_any
    if tk is not None:
        return tk, d_in // tk, d_in

    # No suitable exact divisor: zero-pad d_in to a tile multiple (weights are padded
    # once at prep time; activations are padded per call in the wrapper).
    nk = max(2, splits, -(-d_in // tk_cap))
    nk = _round_up(nk, splits)
    tk = _round_up(-(-d_in // nk), _LANE)
    return tk, nk, tk * nk


# --------------------------------------------------------------------------- #
# Kernels
# --------------------------------------------------------------------------- #


def ensemble_kernel(x_r_ref, x_d_ref, wab_ref, bias_ref, wc_ref, bc_ref,
                    out_ref, acc_r_ref, acc_d_ref, *, feat_a: int):
    """Single-core path: one grid step along the contraction (d_in) axis.

    x_r_ref / x_d_ref : (B, tk)              f32 (cast to bf16 on the VPU here)
    wab_ref           : (tk, featA+featB)    bf16 concatenated [Wa | Wb] K tile
    bias_ref          : (1, featA+featB)     f32  concatenated [ba | bb]
    wc_ref            : (feat, nb_classes)   f32  classifier weight (tiny)
    bc_ref            : (1, nb_classes)      f32  classifier bias
    out_ref           : (B, nb_classes)      f32
    acc_*_ref         : (B, featA+featB)     f32  VMEM accumulators (persist over k)
    """
    k = pl.program_id(0)

    @pl.when(k == 0)
    def _init():
        acc_r_ref[...] = jnp.zeros_like(acc_r_ref)
        acc_d_ref[...] = jnp.zeros_like(acc_d_ref)

    # One fused weight stream, two small MXU pushes: bf16 x bf16 -> f32 accumulate.
    # Only the [:, :feat_a] block of acc_r and [:, feat_a:] block of acc_d are used;
    # the wasted MXU work is hidden under the weight DMA (byte-bound kernel).
    w = wab_ref[...]
    acc_r_ref[...] += jnp.dot(x_r_ref[...].astype(w.dtype), w,
                              preferred_element_type=jnp.float32)
    acc_d_ref[...] += jnp.dot(x_d_ref[...].astype(w.dtype), w,
                              preferred_element_type=jnp.float32)

    @pl.when(k == pl.num_programs(0) - 1)
    def _finalize():
        r1 = jnp.maximum(acc_r_ref[...] + bias_ref[...], 0.0)   # relu(xR@Wab + b)
        r2 = jnp.maximum(acc_d_ref[...] + bias_ref[...], 0.0)   # relu(xD@Wab + b)
        # Column-select gives exactly relu(cat(x1, x2)) without any lane slicing:
        # cols [0, feat_a) come from the xR stream, cols [feat_a, feat) from xD.
        col = jax.lax.broadcasted_iota(jnp.int32, r1.shape, 1)
        r_cat = jnp.where(col < feat_a, r1, r2)                 # (B, feat)
        out = jnp.dot(r_cat, wc_ref[...],
                      preferred_element_type=jnp.float32) + bc_ref[...]
        out_ref[...] = out.astype(out_ref.dtype)


def ensemble_partial_kernel(x_r_ref, x_d_ref, wab_ref, part_r_ref, part_d_ref):
    """Split-K path (multi-TensorCore): grid = (splits, k). Each split streams a
    disjoint K range of the weights and accumulates its partial pre-activation sums
    directly into its own output block. The tiny bias/relu/concat/classifier
    epilogue is applied once AFTER summing partials (relu is nonlinear)."""
    k = pl.program_id(1)

    @pl.when(k == 0)
    def _init():
        part_r_ref[...] = jnp.zeros_like(part_r_ref)
        part_d_ref[...] = jnp.zeros_like(part_d_ref)

    w = wab_ref[...]
    part_r_ref[...] += jnp.dot(x_r_ref[...].astype(w.dtype), w,
                               preferred_element_type=jnp.float32)
    part_d_ref[...] += jnp.dot(x_d_ref[...].astype(w.dtype), w,
                               preferred_element_type=jnp.float32)


# --------------------------------------------------------------------------- #
# Host-side wrappers
# --------------------------------------------------------------------------- #


def prepare_ensemble_params(params, compute_dtype=jnp.bfloat16, *,
                            num_k_splits=None, batch_hint=8,
                            streamed_vmem_budget_bytes=_STREAM_VMEM_BUDGET_BYTES):
    """One-time weight prep (outside the per-call path):
       - fuse the two backbone-head weights into one [d_in, featA+featB] bf16 slab,
       - plan the K tiling against the VMEM budget (padding the slab if needed),
       - keep biases and the tiny classifier weight in f32."""
    wa, ba = params["wa"], params["ba"]
    wb, bb = params["wb"], params["bb"]
    wc, bc = params["wc"], params["bc"]
    d_in = int(wa.shape[0])
    feat_a, feat_b = int(wa.shape[1]), int(wb.shape[1])
    feat = feat_a + feat_b

    if num_k_splits is None:
        num_k_splits = _default_num_k_splits()
    num_k_splits = max(1, int(num_k_splits))

    tk, nk_total, d_pad = _plan_k_tiling(d_in, feat, num_k_splits, batch_hint,
                                         streamed_vmem_budget_bytes)

    wab = jnp.concatenate([wa, wb], axis=1).astype(compute_dtype)
    if d_pad > d_in:
        wab = jnp.pad(wab, ((0, d_pad - d_in), (0, 0)))

    return {
        "wab": wab,
        "bias_ab": jnp.concatenate([ba, bb]).reshape(1, -1).astype(jnp.float32),
        "wc": wc.astype(jnp.float32),
        "bc": bc.reshape(1, -1).astype(jnp.float32),
        "feat_a": feat_a,
        "feat": feat,
        "d_in": d_in,
        "d_pad": d_pad,
        "tk": tk,
        "nk_total": nk_total,
        "num_k_splits": num_k_splits,
        "compute_dtype": compute_dtype,
    }


def my_ensemble_forward(xR, xD, prepped):
    """xR, xD: [B, C, H, W] float32 (NCHW).  Returns [B, nb_classes] float32."""
    B = xR.shape[0]
    wab, bias_ab = prepped["wab"], prepped["bias_ab"]
    wc, bc = prepped["wc"], prepped["bc"]
    feat_a, feat = prepped["feat_a"], prepped["feat"]
    d_in, d_pad = prepped["d_in"], prepped["d_pad"]
    tk, nk, splits = prepped["tk"], prepped["nk_total"], prepped["num_k_splits"]
    nb_classes = wc.shape[1]

    # x.view(B, -1): reshape only (free metadata view). NO wrapper-side cast/concat —
    # activations stream into the kernel in their original dtype and are cast to bf16
    # on the VPU inside the kernel (removes an extra HBM pass).
    xr = xR.reshape(B, -1)
    xd = xD.reshape(B, -1)
    if d_pad > d_in:
        # TODO(synk): this pad is one extra HBM pass over the activations; only taken
        # when d_in has no 128-aligned divisor under the VMEM tile budget.
        xr = jnp.pad(xr, ((0, 0), (0, d_pad - d_in)))
        xd = jnp.pad(xd, ((0, 0), (0, d_pad - d_in)))

    cost = pl.CostEstimate(
        flops=2 * (2 * B) * d_pad * feat + 2 * B * feat * nb_classes,
        transcendentals=0,
        bytes_accessed=(2 * B * d_pad * xr.dtype.itemsize
                        + d_pad * feat * wab.dtype.itemsize
                        + feat * 4 + feat * nb_classes * 4 + nb_classes * 4
                        + splits * 2 * B * feat * 4),
    )
    cparams = pltpu.CompilerParams(
        dimension_semantics=(("parallel", "arbitrary") if splits > 1
                             else ("arbitrary",)),
        vmem_limit_bytes=_VMEM_LIMIT_BYTES,
    )

    if splits == 1:
        kernel = functools.partial(ensemble_kernel, feat_a=feat_a)
        grid_spec = pltpu.PrefetchScalarGridSpec(
            num_scalar_prefetch=0,
            grid=(nk,),
            in_specs=[
                pl.BlockSpec((B, tk), lambda k: (0, k)),        # stream K tiles of xR
                pl.BlockSpec((B, tk), lambda k: (0, k)),        # stream K tiles of xD
                # NOTE: if a trace shows the weight DMA still exposed after the big K
                # tiles, bump this stream with pipeline_mode=pl.Buffered(3).
                pl.BlockSpec((tk, feat), lambda k: (k, 0)),     # stream K tiles of [Wa|Wb]
                pl.BlockSpec((1, feat), lambda k: (0, 0)),      # resident
                pl.BlockSpec((feat, nb_classes), lambda k: (0, 0)),  # resident
                pl.BlockSpec((1, nb_classes), lambda k: (0, 0)),     # resident
            ],
            out_specs=pl.BlockSpec((B, nb_classes), lambda k: (0, 0)),
            scratch_shapes=[pltpu.VMEM((B, feat), jnp.float32),
                            pltpu.VMEM((B, feat), jnp.float32)],
        )
        return pl.pallas_call(
            kernel,
            out_shape=jax.ShapeDtypeStruct((B, nb_classes), jnp.float32),
            grid_spec=grid_spec,
            compiler_params=cparams,
            cost_estimate=cost,
        )(xr, xd, wab, bias_ab, wc, bc)

    # splits >= 2: leading "parallel" axis so multi-TC chips (v7x / megacore) stream
    # disjoint K halves of the weights concurrently; partial pre-activation sums are
    # combined and the tiny epilogue applied once in XLA.
    kps = nk // splits
    grid_spec = pltpu.PrefetchScalarGridSpec(
        num_scalar_prefetch=0,
        grid=(splits, kps),
        in_specs=[
            pl.BlockSpec((B, tk), lambda s, k: (0, s * kps + k)),
            pl.BlockSpec((B, tk), lambda s, k: (0, s * kps + k)),
            pl.BlockSpec((tk, feat), lambda s, k: (s * kps + k, 0)),
        ],
        out_specs=[
            pl.BlockSpec((None, B, feat), lambda s, k: (s, 0, 0)),
            pl.BlockSpec((None, B, feat), lambda s, k: (s, 0, 0)),
        ],
    )
    parts_r, parts_d = pl.pallas_call(
        ensemble_partial_kernel,
        out_shape=(jax.ShapeDtypeStruct((splits, B, feat), jnp.float32),
                   jax.ShapeDtypeStruct((splits, B, feat), jnp.float32)),
        grid_spec=grid_spec,
        compiler_params=cparams,
        cost_estimate=cost,
    )(xr, xd, wab)

    # Tiny epilogue on (B, feat): sum partials BEFORE the nonlinear relu.
    r1 = jnp.maximum(parts_r.sum(axis=0) + bias_ab, 0.0)   # relu(xR@Wab + b)
    r2 = jnp.maximum(parts_d.sum(axis=0) + bias_ab, 0.0)   # relu(xD@Wab + b)
    x_cat = jnp.concatenate([r1[:, :feat_a], r2[:, feat_a:]], axis=1)
    return x_cat @ wc + bc


# --------------------------------------------------------------------------- #
# References
# --------------------------------------------------------------------------- #


def reference_forward_f32(xR, xD, params):
    B = xR.shape[0]
    x1 = xR.reshape(B, -1) @ params["wa"] + params["ba"]
    x2 = xD.reshape(B, -1) @ params["wb"] + params["bb"]
    x = jnp.concatenate([x1, x2], axis=1)
    return jax.nn.relu(x) @ params["wc"] + params["bc"]


def reference_forward_kernel_precision(xR, xD, params, compute_dtype=jnp.bfloat16):
    # Same math as the kernel: bf16-rounded activations / backbone weights,
    # f32 accumulation, f32 classifier.
    B = xR.shape[0]
    rd = lambda a: a.astype(compute_dtype).astype(jnp.float32)
    x1 = rd(xR.reshape(B, -1)) @ rd(params["wa"]) + params["ba"]
    x2 = rd(xD.reshape(B, -1)) @ rd(params["wb"]) + params["bb"]
    x = jnp.concatenate([x1, x2], axis=1)
    return jax.nn.relu(x) @ params["wc"] + params["bc"]


if __name__ == "__main__":
    # Small shapes consistent with the forward pass.
    B, C, H, W = 2, 4, 16, 16
    feat_a, feat_b = 32, 32        # ModelA._fc.out_features / ModelB._fc.out_features
    nb_classes = 2
    d_in = C * H * W

    key = jax.random.PRNGKey(0)
    kxr, kxd, kwa, kba, kwb, kbb, kwc, kbc = jax.random.split(key, 8)

    xR = jax.random.normal(kxr, (B, C, H, W), dtype=jnp.float32)
    xD = jax.random.normal(kxd, (B, C, H, W), dtype=jnp.float32)

    params = {
        "wa": jax.random.normal(kwa, (d_in, feat_a), dtype=jnp.float32) * 0.02,
        "ba": jax.random.normal(kba, (feat_a,), dtype=jnp.float32) * 0.02,
        "wb": jax.random.normal(kwb, (d_in, feat_b), dtype=jnp.float32) * 0.02,
        "bb": jax.random.normal(kbb, (feat_b,), dtype=jnp.float32) * 0.02,
        "wc": jax.random.normal(kwc, (feat_a + feat_b, nb_classes),
                                dtype=jnp.float32) * 0.1,
        "bc": jax.random.normal(kbc, (nb_classes,), dtype=jnp.float32) * 0.1,
    }

    ref_kp = reference_forward_kernel_precision(xR, xD, params)
    ref_f32 = reference_forward_f32(xR, xD, params)

    def check(out, tag):
        out = jax.block_until_ready(out)
        assert out.shape == (B, nb_classes)
        assert jnp.allclose(out, ref_kp, atol=5e-3, rtol=5e-3), \
            f"[{tag}] mismatch vs kernel-precision ref: {jnp.max(jnp.abs(out - ref_kp))}"
        assert jnp.allclose(out, ref_f32, atol=5e-2, rtol=5e-2), \
            f"[{tag}] mismatch vs f32 ref: {jnp.max(jnp.abs(out - ref_f32))}"

    # Exercise both code paths regardless of which chip generation this runs on.
    prepped_fused = prepare_ensemble_params(params, num_k_splits=1)
    check(my_ensemble_forward(xR, xD, prepped_fused), "fused")

    prepped_split = prepare_ensemble_params(params, num_k_splits=2)
    check(my_ensemble_forward(xR, xD, prepped_split), "split-K")

    # Auto-selected path for the current chip (1 TC -> fused, multi-TC -> split-K).
    prepped_auto = prepare_ensemble_params(params)
    check(my_ensemble_forward(xR, xD, prepped_auto), "auto")

    print("KERNEL_OK")
</pallas_src>

<mosaic_0001>
module attributes {stable_mosaic.version = 11 : i64} {
  func.func @ensemble_kernel(%arg0: i32, %arg1: memref<2x512xf32, #tpu.memory_space<vmem>>, %arg2: memref<2x512xf32, #tpu.memory_space<vmem>>, %arg3: memref<512x64xbf16, #tpu.memory_space<vmem>>, %arg4: memref<1x64xf32, #tpu.memory_space<vmem>>, %arg5: memref<64x2xf32, #tpu.memory_space<vmem>>, %arg6: memref<1x2xf32, #tpu.memory_space<vmem>>, %arg7: memref<2x2xf32, #tpu.memory_space<vmem>>, %arg8: memref<2x64xf32, #tpu.memory_space<vmem>>, %arg9: memref<2x64xf32, #tpu.memory_space<vmem>>) attributes {dimension_semantics = [#tpu.dimension_semantics<arbitrary>], iteration_bounds = array<i64: 2>, scalar_prefetch = 0 : i64, scratch_operands = 2 : i64, tpu.core_type = #tpu.core_type<tc>, window_params = [{transform_indices = @transform_0, window_bounds = array<i64: 2, 512>}, {transform_indices = @transform_1, window_bounds = array<i64: 2, 512>}, {transform_indices = @transform_2, window_bounds = array<i64: 512, 64>}, {pipeline_mode = #tpu.pipeline_mode<synchronous>, transform_indices = @transform_3, window_bounds = array<i64: 1, 64>}, {pipeline_mode = #tpu.pipeline_mode<synchronous>, transform_indices = @transform_4, window_bounds = array<i64: 64, 2>}, {pipeline_mode = #tpu.pipeline_mode<synchronous>, transform_indices = @transform_5, window_bounds = array<i64: 1, 2>}, {pipeline_mode = #tpu.pipeline_mode<synchronous>, transform_indices = @transform_6, window_bounds = array<i64: 2, 2>}]} {
    %c0_i32 = arith.constant 0 : i32
    %0 = arith.cmpi eq, %arg0, %c0_i32 : i32
    %1 = arith.extui %0 : i1 to i32
    %c0_i32_0 = arith.constant 0 : i32
    %2 = arith.cmpi ne, %1, %c0_i32_0 : i32
    scf.if %2 {
      %cst_16 = arith.constant 0.000000e+00 : f32
      %19 = vector.broadcast %cst_16 : f32 to vector<2x64xf32>
      %c0_17 = arith.constant 0 : index
      %c0_18 = arith.constant 0 : index
      %20 = vector.load %arg8[%c0_17, %c0_18] : memref<2x64xf32, #tpu.memory_space<vmem>>, vector<2x64xf32>
      tpu.vector_store %arg8[%c0_17, %c0_18], %19 {strides = array<i32>} : memref<2x64xf32, #tpu.memory_space<vmem>>, vector<2x64xf32>,
      %cst_19 = arith.constant 0.000000e+00 : f32
      %21 = vector.broadcast %cst_19 : f32 to vector<2x64xf32>
      %c0_20 = arith.constant 0 : index
      %c0_21 = arith.constant 0 : index
      %22 = vector.load %arg9[%c0_20, %c0_21] : memref<2x64xf32, #tpu.memory_space<vmem>>, vector<2x64xf32>
      tpu.vector_store %arg9[%c0_20, %c0_21], %21 {strides = array<i32>} : memref<2x64xf32, #tpu.memory_space<vmem>>, vector<2x64xf32>,
    } else {
    }
    %c0 = arith.constant 0 : index
    %c0_1 = arith.constant 0 : index
    %3 = vector.load %arg3[%c0, %c0_1] : memref<512x64xbf16, #tpu.memory_space<vmem>>, vector<512x64xbf16>
    %c0_2 = arith.constant 0 : index
    %c0_3 = arith.constant 0 : index
    %4 = vector.load %arg8[%c0_2, %c0_3] : memref<2x64xf32, #tpu.memory_space<vmem>>, vector<2x64xf32>
    %c0_4 = arith.constant 0 : index
    %c0_5 = arith.constant 0 : index
    %5 = vector.load %arg1[%c0_4, %c0_5] : memref<2x512xf32, #tpu.memory_space<vmem>>, vector<2x512xf32>
    %6 = arith.truncf %5 : vector<2x512xf32> to vector<2x512xbf16>
    %cst = arith.constant dense<0.000000e+00> : vector<2x64xf32>
    %7 = tpu.matmul %6, %3, %cst {dimension_numbers = #tpu.dot_dimension_numbers<[1], [0], [0], [1], [0, 0, 1, 1], [], []>} : vector<2x512xbf16>, vector<512x64xbf16>, vector<2x64xf32> -> vector<2x64xf32>
    %8 = arith.addf %4, %7 : vector<2x64xf32>
    %c0_6 = arith.constant 0 : index
    %c0_7 = arith.constant 0 : index
    %9 = vector.load %arg8[%c0_6, %c0_7] : memref<2x64xf32, #tpu.memory_space<vmem>>, vector<2x64xf32>
    tpu.vector_store %arg8[%c0_6, %c0_7], %8 {strides = array<i32>} : memref<2x64xf32, #tpu.memory_space<vmem>>, vector<2x64xf32>,
    %c0_8 = arith.constant 0 : index
    %c0_9 = arith.constant 0 : index
    %10 = vector.load %arg9[%c0_8, %c0_9] : memref<2x64xf32, #tpu.memory_space<vmem>>, vector<2x64xf32>
    %c0_10 = arith.constant 0 : index
    %c0_11 = arith.constant 0 : index
    %11 = vector.load %arg2[%c0_10, %c0_11] : memref<2x512xf32, #tpu.memory_space<vmem>>, vector<2x512xf32>
    %12 = arith.truncf %11 : vector<2x512xf32> to vector<2x512xbf16>
    %cst_12 = arith.constant dense<0.000000e+00> : vector<2x64xf32>
    %13 = tpu.matmul %12, %3, %cst_12 {dimension_numbers = #tpu.dot_dimension_numbers<[1], [0], [0], [1], [0, 0, 1, 1], [], []>} : vector<2x512xbf16>, vector<512x64xbf16>, vector<2x64xf32> -> vector<2x64xf32>
    %14 = arith.addf %10, %13 : vector<2x64xf32>
    %c0_13 = arith.constant 0 : index
    %c0_14 = arith.constant 0 : index
    %15 = vector.load %arg9[%c0_13, %c0_14] : memref<2x64xf32, #tpu.memory_space<vmem>>, vector<2x64xf32>
    tpu.vector_store %arg9[%c0_13, %c0_14], %14 {strides = array<i32>} : memref<2x64xf32, #tpu.memory_space<vmem>>, vector<2x64xf32>,
    %c1_i32 = arith.constant 1 : i32
    %16 = arith.cmpi eq, %arg0, %c1_i32 : i32
    %17 = arith.extui %16 : i1 to i32
    %c0_i32_15 = arith.constant 0 : i32
    %18 = arith.cmpi ne, %17, %c0_i32_15 : i32
    scf.if %18 {
      %c0_16 = arith.constant 0 : index
      %c0_17 = arith.constant 0 : index
      %19 = vector.load %arg8[%c0_16, %c0_17] : memref<2x64xf32, #tpu.memory_space<vmem>>, vector<2x64xf32>
      %c0_18 = arith.constant 0 : index
      %c0_19 = arith.constant 0 : index
      %20 = vector.load %arg4[%c0_18, %c0_19] : memref<1x64xf32, #tpu.memory_space<vmem>>, vector<1x64xf32>
      %21 = vector.broadcast %20 : vector<1x64xf32> to vector<2x64xf32>
      %22 = arith.addf %19, %21 : vector<2x64xf32>
      %cst_20 = arith.constant 0.000000e+00 : f32
      %23 = vector.broadcast %cst_20 : f32 to vector<2x64xf32>
      %24 = arith.maximumf %22, %23 : vector<2x64xf32>
      %c0_21 = arith.constant 0 : index
      %c0_22 = arith.constant 0 : index
      %25 = vector.load %arg9[%c0_21, %c0_22] : memref<2x64xf32, #tpu.memory_space<vmem>>, vector<2x64xf32>
      %c0_23 = arith.constant 0 : index
      %c0_24 = arith.constant 0 : index
      %26 = vector.load %arg4[%c0_23, %c0_24] : memref<1x64xf32, #tpu.memory_space<vmem>>, vector<1x64xf32>
      %27 = vector.broadcast %26 : vector<1x64xf32> to vector<2x64xf32>
      %28 = arith.addf %25, %27 : vector<2x64xf32>
      %cst_25 = arith.constant 0.000000e+00 : f32
      %29 = vector.broadcast %cst_25 : f32 to vector<2x64xf32>
      %30 = arith.maximumf %28, %29 : vector<2x64xf32>
      %31 = tpu.iota {dimensions = array<i32: 1>} : vector<2x64xi32>
      %c32_i32 = arith.constant 32 : i32
      %32 = vector.broadcast %c32_i32 : i32 to vector<2x64xi32>
      %33 = arith.cmpi slt, %31, %32 : vector<2x64xi32>
      %34 = arith.select %33, %24, %30 : vector<2x64xi1>, vector<2x64xf32>
      %c0_26 = arith.constant 0 : index
      %c0_27 = arith.constant 0 : index
      %35 = vector.load %arg5[%c0_26, %c0_27] : memref<64x2xf32, #tpu.memory_space<vmem>>, vector<64x2xf32>
      %cst_28 = arith.constant dense<0.000000e+00> : vector<2x2xf32>
      %36 = tpu.matmul %34, %35, %cst_28 {dimension_numbers = #tpu.dot_dimension_numbers<[1], [0], [0], [1], [0, 0, 1, 1], [], []>} : vector<2x64xf32>, vector<64x2xf32>, vector<2x2xf32> -> vector<2x2xf32>
      %c0_29 = arith.constant 0 : index
      %c0_30 = arith.constant 0 : index
      %37 = vector.load %arg6[%c0_29, %c0_30] : memref<1x2xf32, #tpu.memory_space<vmem>>, vector<1x2xf32>
      %38 = vector.broadcast %37 : vector<1x2xf32> to vector<2x2xf32>
      %39 = arith.addf %36, %38 : vector<2x2xf32>
      %c0_31 = arith.constant 0 : index
      %c0_32 = arith.constant 0 : index
      %40 = vector.load %arg7[%c0_31, %c0_32] : memref<2x2xf32, #tpu.memory_space<vmem>>, vector<2x2xf32>
      tpu.vector_store %arg7[%c0_31, %c0_32], %39 {strides = array<i32>} : memref<2x2xf32, #tpu.memory_space<vmem>>, vector<2x2xf32>,
    } else {
    }
    return
  }
  func.func @transform_0(%arg0: i32) -> (i32, i32) {
    %c0_i32 = arith.constant 0 : i32
    %c0_i32_0 = arith.constant 0 : i32
    return %c0_i32, %arg0 : i32, i32
  }
  func.func @transform_1(%arg0: i32) -> (i32, i32) {
    %c0_i32 = arith.constant 0 : i32
    %c0_i32_0 = arith.constant 0 : i32
    return %c0_i32, %arg0 : i32, i32
  }
  func.func @transform_2(%arg0: i32) -> (i32, i32) {
    %c0_i32 = arith.constant 0 : i32
    %c0_i32_0 = arith.constant 0 : i32
    return %arg0, %c0_i32 : i32, i32
  }
  func.func @transform_3(%arg0: i32) -> (i32, i32) {
    %c0_i32 = arith.constant 0 : i32
    %c0_i32_0 = arith.constant 0 : i32
    %c0_i32_1 = arith.constant 0 : i32
    return %c0_i32, %c0_i32_0 : i32, i32
  }
  func.func @transform_4(%arg0: i32) -> (i32, i32) {
    %c0_i32 = arith.constant 0 : i32
    %c0_i32_0 = arith.constant 0 : i32
    %c0_i32_1 = arith.constant 0 : i32
    return %c0_i32, %c0_i32_0 : i32, i32
  }
  func.func @transform_5(%arg0: i32) -> (i32, i32) {
    %c0_i32 = arith.constant 0 : i32
    %c0_i32_0 = arith.constant 0 : i32
    %c0_i32_1 = arith.constant 0 : i32
    return %c0_i32, %c0_i32_0 : i32, i32
  }
  func.func @transform_6(%arg0: i32) -> (i32, i32) {
    %c0_i32 = arith.constant 0 : i32
    %c0_i32_0 = arith.constant 0 : i32
    %c0_i32_1 = arith.constant 0 : i32
    return %c0_i32, %c0_i32_0 : i32, i32
  }
}

</mosaic_0001>

<llo_original>
// kernel: tpu_custom_call.1
$region0: #{tpu_custom_call.1}
  #allocation0 [shape = 'u32[]', space=smem, size = 0x4, offset = 0x4, fixed_abs, tag = 'smem constant byte address 0x4 - core index']
  #allocation1 [shape = 'u32[144,128]{1,0:T(1,128)}', space=vmem, size = 0x12000, scoped, tag = 'internal scratch']
  #allocation2 [shape = 'f32[2,64]{1,0:T(2,128)}', space=vmem, size = 0x400, scoped, tag = 'scratch operand']
  #allocation3 [shape = 'f32[2,64]{1,0:T(2,128)}', space=vmem, size = 0x400, scoped, tag = 'scratch operand']
  %s0 = inlined_call_operand.vmem [shape: f32[2,1024], index: 0, kind: input, shape index: {}]
  %s1 = inlined_call_operand.vmem [shape: f32[2,1024], index: 1, kind: input, shape index: {}]
  %s2 = inlined_call_operand.vmem [shape: bf16[1024,64], index: 2, kind: input, shape index: {}]
  %s3 = inlined_call_operand.vmem [shape: f32[1,64], index: 3, kind: input, shape index: {}]
  %s4 = inlined_call_operand.vmem [shape: f32[64,2], index: 4, kind: input, shape index: {}]
  %s5 = inlined_call_operand.vmem [shape: f32[1,2], index: 5, kind: input, shape index: {}]
  %s6 = inlined_call_operand.hbm [shape: f32[2,2], index: 6, kind: output, shape index: {}]
  %s7 = sld [smem:[#allocation0]]
  $region65: #{tpu_custom_call.1} parent=0
    _
  %s9 = ssub.s32 1, %s7
  %s10 = scalar_select 0, %s9, %s7
  $region1: #{tpu_custom_call.1} parent=0
    #allocation4 [shape = 'u8[1024]{0}', space=vmem, size = 0x400, scoped, tag = 'output window, operand 0, single buffered']
    #allocation5 [shape = 's32[2]{0}', space=sflag, size = 0x8, scoped, tag = 'scoped memory for tpu_custom_call.1']
    %11 = vsyncpa [#allocation5], 0
    loop: start=0, step=1, limit=4
    $region2: #{tpu_custom_call.1} parent=1 // loop_pre_header
      _
    $region3: #{tpu_custom_call.1} parent=1 // loop_header
      %s13 = sphi 0, %s17
      %p14 = scmp.ge.s32.totalorder %s13, 4
      %s23 = sphi 0, %s25
      %s26 = sphi 0, %s23
      %s27 = sphi 0, %s26
      %s43 = sphi 0, %s27
      %s49 = sphi 0, %s51
      %s52 = sphi 0, %s49
      %s53 = sphi 0, %s52
      %s69 = sphi 0, %s53
      %s75 = sphi 0, %s77
      %s78 = sphi 0, %s75
      %s79 = sphi 0, %s78
      %s95 = sphi 0, %s79
      %s99 = sphi 0, %s99
      %s101 = sphi 0, %s99
      %s102 = sphi 0, %s101
      %s116 = sphi 0, %s102
      %s120 = sphi 0, %s120
      %s122 = sphi 0, %s120
      %s123 = sphi 0, %s122
      %s137 = sphi 0, %s123
      %s141 = sphi 0, %s141
      %s143 = sphi 0, %s141
      %s144 = sphi 0, %s143
      %s158 = sphi 0, %s144
      %s162 = sphi 0, %s162
      %s164 = sphi 0, %s162
      %s165 = sphi 0, %s164
      %s179 = sphi 0, %s165
    $region4: #{tpu_custom_call.1} parent=1 // loop_header_branch
      %16 = sbr.rel (%p14) target = $region8
    $region5: #{tpu_custom_call.1} parent=1 // loop_body
      %s18 = ssub.s32 %s13, 1
      %s19 = ssub.s32 %s13, 2
      %s20 = sadd.s32 %s13, 1
      %s21 = ssub.s32 %s13, %s20
      %p22 = scmp.eq.s32.totalorder %s21, 0
      %s24 = sadd.s32 %s23, 1
      %s25 = scalar_select %p22, %s23, %s24
      %p28 = pneg %p22
      %p29 = scmp.eq.s32.totalorder %s13, 1
      %p30 = por %p28, %p29
      %p31 = scmp.ne.s32.totalorder %s23, %s26
      %p32 = scmp.eq.s32.totalorder %s13, 0
      %p33 = por %p31, %p32
      %p34 = scmp.ne.s32.totalorder %s23, %s26
      %p35 = scmp.eq.s32.totalorder %s18, 1
      %p36 = por %p34, %p35
      %p37 = scmp.ne.s32.totalorder %s26, %s27
      %p38 = scmp.eq.s32.totalorder %s18, 0
      %p39 = por %p37, %p38
      %p40 = scmp.ne.s32.totalorder %s26, %s27
      %p41 = scmp.eq.s32.totalorder %s19, 1
      %p42 = por %p40, %p41
      %p44 = scmp.ne.s32.totalorder %s27, %s43
      %p45 = scmp.eq.s32.totalorder %s19, 0
      %p46 = por %p44, %p45
      %s47 = ssub.s32 %s13, %s20
      %p48 = scmp.eq.s32.totalorder %s47, 0
      %s50 = sadd.s32 %s49, 1
      %s51 = scalar_select %p48, %s49, %s50
      %p54 = pneg %p48
      %p55 = scmp.eq.s32.totalorder %s13, 1
      %p56 = por %p54, %p55
      %p57 = scmp.ne.s32.totalorder %s49, %s52
      %p58 = scmp.eq.s32.totalorder %s13, 0
      %p59 = por %p57, %p58
      %p60 = scmp.ne.s32.totalorder %s49, %s52
      %p61 = scmp.eq.s32.totalorder %s18, 1
      %p62 = por %p60, %p61
      %p63 = scmp.ne.s32.totalorder %s52, %s53
      %p64 = scmp.eq.s32.totalorder %s18, 0
      %p65 = por %p63, %p64
      %p66 = scmp.ne.s32.totalorder %s52, %s53
      %p67 = scmp.eq.s32.totalorder %s19, 1
      %p68 = por %p66, %p67
      %p70 = scmp.ne.s32.totalorder %s53, %s69
      %p71 = scmp.eq.s32.totalorder %s19, 0
      %p72 = por %p70, %p71
      %s73 = ssub.s32 %s13, %s20
      %p74 = scmp.eq.s32.totalorder %s73, 0
      %s76 = sadd.s32 %s75, 1
      %s77 = scalar_select %p74, %s75, %s76
      %p80 = pneg %p74
      %p81 = scmp.eq.s32.totalorder %s13, 1
      %p82 = por %p80, %p81
      %p83 = scmp.ne.s32.totalorder %s75, %s78
      %p84 = scmp.eq.s32.totalorder %s13, 0
      %p85 = por %p83, %p84
      %p86 = scmp.ne.s32.totalorder %s75, %s78
      %p87 = scmp.eq.s32.totalorder %s18, 1
      %p88 = por %p86, %p87
      %p89 = scmp.ne.s32.totalorder %s78, %s79
      %p90 = scmp.eq.s32.totalorder %s18, 0
      %p91 = por %p89, %p90
      %p92 = scmp.ne.s32.totalorder %s78, %s79
      %p93 = scmp.eq.s32.totalorder %s19, 1
      %p94 = por %p92, %p93
      %p96 = scmp.ne.s32.totalorder %s79, %s95
      %p97 = scmp.eq.s32.totalorder %s19, 0
      %p98 = por %p96, %p97
      %s100 = sadd.s32 %s99, 1
      %p103 = scmp.eq.s32.totalorder %s13, 1
      %p104 = scmp.ne.s32.totalorder %s99, %s101
      %p105 = scmp.eq.s32.totalorder %s13, 0
      %p106 = por %p104, %p105
      %p107 = scmp.ne.s32.totalorder %s99, %s101
      %p108 = scmp.eq.s32.totalorder %s18, 1
      %p109 = por %p107, %p108
      %p110 = scmp.ne.s32.totalorder %s101, %s102
      %p111 = scmp.eq.s32.totalorder %s18, 0
      %p112 = por %p110, %p111
      %p113 = scmp.ne.s32.totalorder %s101, %s102
      %p114 = scmp.eq.s32.totalorder %s19, 1
      %p115 = por %p113, %p114
      %p117 = scmp.ne.s32.totalorder %s102, %s116
      %p118 = scmp.eq.s32.totalorder %s19, 0
      %p119 = por %p117, %p118
      %s121 = sadd.s32 %s120, 1
      %p124 = scmp.eq.s32.totalorder %s13, 1
      %p125 = scmp.ne.s32.totalorder %s120, %s122
      %p126 = scmp.eq.s32.totalorder %s13, 0
      %p127 = por %p125, %p126
      %p128 = scmp.ne.s32.totalorder %s120, %s122
      %p129 = scmp.eq.s32.totalorder %s18, 1
      %p130 = por %p128, %p129
      %p131 = scmp.ne.s32.totalorder %s122, %s123
      %p132 = scmp.eq.s32.totalorder %s18, 0
      %p133 = por %p131, %p132
      %p134 = scmp.ne.s32.totalorder %s122, %s123
      %p135 = scmp.eq.s32.totalorder %s19, 1
      %p136 = por %p134, %p135
      %p138 = scmp.ne.s32.totalorder %s123, %s137
      %p139 = scmp.eq.s32.totalorder %s19, 0
      %p140 = por %p138, %p139
      %s142 = sadd.s32 %s141, 1
      %p145 = scmp.eq.s32.totalorder %s13, 1
      %p146 = scmp.ne.s32.totalorder %s141, %s143
      %p147 = scmp.eq.s32.totalorder %s13, 0
      %p148 = por %p146, %p147
      %p149 = scmp.ne.s32.totalorder %s141, %s143
      %p150 = scmp.eq.s32.totalorder %s18, 1
      %p151 = por %p149, %p150
      %p152 = scmp.ne.s32.totalorder %s143, %s144
      %p153 = scmp.eq.s32.totalorder %s18, 0
      %p154 = por %p152, %p153
      %p155 = scmp.ne.s32.totalorder %s143, %s144
      %p156 = scmp.eq.s32.totalorder %s19, 1
      %p157 = por %p155, %p156
      %p159 = scmp.ne.s32.totalorder %s144, %s158
      %p160 = scmp.eq.s32.totalorder %s19, 0
      %p161 = por %p159, %p160
      %s163 = sadd.s32 %s162, 1
      %p166 = scmp.eq.s32.totalorder %s13, 1
      %p167 = scmp.ne.s32.totalorder %s162, %s164
      %p168 = scmp.eq.s32.totalorder %s13, 0
      %p169 = por %p167, %p168
      %p170 = scmp.ne.s32.totalorder %s162, %s164
      %p171 = scmp.eq.s32.totalorder %s18, 1
      %p172 = por %p170, %p171
      %p173 = scmp.ne.s32.totalorder %s164, %s165
      %p174 = scmp.eq.s32.totalorder %s18, 0
      %p175 = por %p173, %p174
      %p176 = scmp.ne.s32.totalorder %s164, %s165
      %p177 = scmp.eq.s32.totalorder %s19, 1
      %p178 = por %p176, %p177
      %p180 = scmp.ne.s32.totalorder %s165, %s179
      %p181 = scmp.eq.s32.totalorder %s19, 0
      %p182 = por %p180, %p181
      %p183 = scmp.le.s32.totalorder 1, %s13
      %p184 = scmp.lt.s32.totalorder %s13, 3
      %p185 = pnand %p183, %p184
      %p186 = pneg %p185
      // Predicated region
      $region9: #{tpu_custom_call.1} parent=5 // pred_check
        _
      $region10: #{tpu_custom_call.1} parent=5 // pred_check_branch
        %188 = sbr.rel (%p185) target = $region12
      $region11: #{tpu_custom_call.1} parent=5 // pred_region
        %s189 = ssub.s32 %s13, 1
        // Predicated region
        $region13: #{tpu_custom_call.1} parent=11 // pred_check
          %p190 = pneg %p112
        $region14: #{tpu_custom_call.1} parent=11 // pred_check_branch
          %192 = sbr.rel (%p190) target = $region16
        $region15: #{tpu_custom_call.1} parent=11 // pred_region
          _
        $region16: #{tpu_custom_call.1} parent=11 // pred_fallthru
          _
        // Predicated region
        $region17: #{tpu_custom_call.1} parent=11 // pred_check
          %p193 = pneg %p133
        $region18: #{tpu_custom_call.1} parent=11 // pred_check_branch
          %195 = sbr.rel (%p193) target = $region20
        $region19: #{tpu_custom_call.1} parent=11 // pred_region
          _
        $region20: #{tpu_custom_call.1} parent=11 // pred_fallthru
          _
        // Predicated region
        $region21: #{tpu_custom_call.1} parent=11 // pred_check
          %p196 = pneg %p154
        $region22: #{tpu_custom_call.1} parent=11 // pred_check_branch
          %198 = sbr.rel (%p196) target = $region24
        $region23: #{tpu_custom_call.1} parent=11 // pred_region
          _
        $region24: #{tpu_custom_call.1} parent=11 // pred_fallthru
          _
      $region12: #{tpu_custom_call.1} parent=5 // pred_fallthru
        _
      %p199 = scmp.lt.s32.totalorder %s13, 2
      // Predicated region
      $region25: #{tpu_custom_call.1} parent=5 // pred_check
        %p200 = pneg %p199
      $region26: #{tpu_custom_call.1} parent=5 // pred_check_branch
        %202 = sbr.rel (%p200) target = $region28
      $region27: #{tpu_custom_call.1} parent=5 // pred_region
        // Predicated region
        $region29: #{tpu_custom_call.1} parent=27 // pred_check
          %p203 = pneg %p33
        $region30: #{tpu_custom_call.1} parent=27 // pred_check_branch
          %205 = sbr.rel (%p203) target = $region32
        $region31: #{tpu_custom_call.1} parent=27 // pred_region
          %s206 = smul.u32 4, %s13
          %p207 = scmp.lt.s32.totalorder %s206, 7
          %s208 = scalar_select %p207, %s206, 7
          %s209 = smul.addr %s208, 2
          %s210 = scalar_lea.vmem %s0, %s209
          %s211 = smul.u32 4, %s13
        $region32: #{tpu_custom_call.1} parent=27 // pred_fallthru
          _
        // Predicated region
        $region33: #{tpu_custom_call.1} parent=27 // pred_check
          %p212 = pneg %p59
        $region34: #{tpu_custom_call.1} parent=27 // pred_check_branch
          %214 = sbr.rel (%p212) target = $region36
        $region35: #{tpu_custom_call.1} parent=27 // pred_region
          %s215 = smul.u32 4, %s13
          %p216 = scmp.lt.s32.totalorder %s215, 7
          %s217 = scalar_select %p216, %s215, 7
          %s218 = smul.addr %s217, 2
          %s219 = scalar_lea.vmem %s1, %s218
          %s220 = smul.u32 4, %s13
        $region36: #{tpu_custom_call.1} parent=27 // pred_fallthru
          _
        // Predicated region
        $region37: #{tpu_custom_call.1} parent=27 // pred_check
          %p221 = pneg %p85
        $region38: #{tpu_custom_call.1} parent=27 // pred_check_branch
          %223 = sbr.rel (%p221) target = $region40
        $region39: #{tpu_custom_call.1} parent=27 // pred_region
          %s224 = smul.u32 64, %s13
          %p225 = scmp.lt.s32.totalorder %s224, 127
          %s226 = scalar_select %p225, %s224, 127
          %s227 = smul.addr %s226, 4
          %s228 = scalar_lea.vmem %s2, %s227
          %s229 = smul.u32 64, %s13
        $region40: #{tpu_custom_call.1} parent=27 // pred_fallthru
          _
      $region28: #{tpu_custom_call.1} parent=5 // pred_fallthru
        _
      %p230 = scmp.le.s32.totalorder 1, %s13
      %p231 = scmp.lt.s32.totalorder %s13, 3
      %p232 = pnand %p230, %p231
      %p233 = pneg %p232
      // Predicated region
      $region41: #{tpu_custom_call.1} parent=5 // pred_check
        _
      $region42: #{tpu_custom_call.1} parent=5 // pred_check_branch
        %235 = sbr.rel (%p232) target = $region44
      $region43: #{tpu_custom_call.1} parent=5 // pred_region
        %s236 = ssub.s32 %s13, 1
        %s237 = smul.u32 4, %s18
        %p238 = scmp.lt.s32.totalorder %s237, 7
        %s239 = scalar_select %p238, %s237, 7
        %s240 = smul.addr %s239, 2
        %s241 = scalar_lea.vmem %s0, %s240
        %p242 = pneg %p39
        %p243 = pneg %p36
        %s244 = smul.u32 4, %s18
        %p245 = scmp.lt.s32.totalorder %s244, 7
        %s246 = scalar_select %p245, %s244, 7
        %s247 = smul.addr %s246, 2
        %s248 = scalar_lea.vmem %s1, %s247
        %p249 = pneg %p65
        %p250 = pneg %p62
        %s251 = smul.u32 64, %s18
        %p252 = scmp.lt.s32.totalorder %s251, 127
        %s253 = scalar_select %p252, %s251, 127
        %s254 = smul.addr %s253, 4
        %s255 = scalar_lea.vmem %s2, %s254
        %p256 = pneg %p91
        %p257 = pneg %p88
        %p258 = pneg %p112
        %p259 = pneg %p109
        %p260 = pneg %p133
        %p261 = pneg %p130
        %p262 = pneg %p154
        %p263 = pneg %p151
        %p264 = pneg %p175
        %p265 = pneg %p172
        %s266 = smul.u32 4, %s18
        %p267 = scmp.lt.s32.totalorder %s266, 7
        %s268 = scalar_select %p267, %s266, 7
        %s269 = smul.addr %s268, 2
        %s270 = scalar_lea.vmem %s0, %s269
        %s271 = smul.u32 4, %s18
        %s272 = smul.u32 4, %s18
        %p273 = scmp.lt.s32.totalorder %s272, 7
        %s274 = scalar_select %p273, %s272, 7
        %s275 = smul.addr %s274, 2
        %s276 = scalar_lea.vmem %s1, %s275
        %s277 = smul.u32 4, %s18
        %s278 = smul.u32 64, %s18
        %p279 = scmp.lt.s32.totalorder %s278, 127
        %s280 = scalar_select %p279, %s278, 127
        %s281 = smul.addr %s280, 4
        %s282 = scalar_lea.vmem %s2, %s281
        %s283 = smul.u32 64, %s18
        %p285 = scmp.eq.s32.totalorder %s18, 0
        // Predicated region
        $region45: #{tpu_custom_call.1} parent=43 // pred_check
          %p286 = pneg %p285
        $region46: #{tpu_custom_call.1} parent=43 // pred_check_branch
          %288 = sbr.rel (%p286) target = $region48
        $region47: #{tpu_custom_call.1} parent=43 // pred_region
          %vm289 = vcmask 517120
          %290 = vst.msk [vmem:[#allocation2] sm:$0x3] %vm289, 0.0
          %291 = vst.msk [vmem:[#allocation3] sm:$0x3] %vm289, 0.0
        $region48: #{tpu_custom_call.1} parent=43 // pred_fallthru
          _
        %v292 = vld [vmem:[%s282] sm:$0xf]
        %v293 = vld [vmem:[%s282 + $0x4] sm:$0xf]
        %v294 = vld [vmem:[%s282 + $0x8] sm:$0xf]
        %v295 = vld [vmem:[%s282 + $0xc] sm:$0xf]
        %v296 = vld [vmem:[%s282 + $0x10] sm:$0xf]
        %v297 = vld [vmem:[%s282 + $0x14] sm:$0xf]
        %v298 = vld [vmem:[%s282 + $0x18] sm:$0xf]
        %v299 = vld [vmem:[%s282 + $0x1c] sm:$0xf]
        %v300 = vld [vmem:[%s282 + $0x20] sm:$0xf]
        %v301 = vld [vmem:[%s282 + $0x24] sm:$0xf]
        %v302 = vld [vmem:[%s282 + $0x28] sm:$0xf]
        %v303 = vld [vmem:[%s282 + $0x2c] sm:$0xf]
        %v304 = vld [vmem:[%s282 + $0x30] sm:$0xf]
        %v305 = vld [vmem:[%s282 + $0x34] sm:$0xf]
        %v306 = vld [vmem:[%s282 + $0x38] sm:$0xf]
        %v307 = vld [vmem:[%s282 + $0x3c] sm:$0xf]
        %v308 = vld [vmem:[%s282 + $0x40] sm:$0xf]
        %v309 = vld [vmem:[%s282 + $0x44] sm:$0xf]
        %v310 = vld [vmem:[%s282 + $0x48] sm:$0xf]
        %v311 = vld [vmem:[%s282 + $0x4c] sm:$0xf]
        %v312 = vld [vmem:[%s282 + $0x50] sm:$0xf]
        %v313 = vld [vmem:[%s282 + $0x54] sm:$0xf]
        %v314 = vld [vmem:[%s282 + $0x58] sm:$0xf]
        %v315 = vld [vmem:[%s282 + $0x5c] sm:$0xf]
        %v316 = vld [vmem:[%s282 + $0x60] sm:$0xf]
        %v317 = vld [vmem:[%s282 + $0x64] sm:$0xf]
        %v318 = vld [vmem:[%s282 + $0x68] sm:$0xf]
        %v319 = vld [vmem:[%s282 + $0x6c] sm:$0xf]
        %v320 = vld [vmem:[%s282 + $0x70] sm:$0xf]
        %v321 = vld [vmem:[%s282 + $0x74] sm:$0xf]
        %v322 = vld [vmem:[%s282 + $0x78] sm:$0xf]
        %v323 = vld [vmem:[%s282 + $0x7c] sm:$0xf]
        %v324 = vld [vmem:[%s282 + $0x80] sm:$0xf]
        %v325 = vld [vmem:[%s282 + $0x84] sm:$0xf]
        %v326 = vld [vmem:[%s282 + $0x88] sm:$0xf]
        %v327 = vld [vmem:[%s282 + $0x8c] sm:$0xf]
        %v328 = vld [vmem:[%s282 + $0x90] sm:$0xf]
        %v329 = vld [vmem:[%s282 + $0x94] sm:$0xf]
        %v330 = vld [vmem:[%s282 + $0x98] sm:$0xf]
        %v331 = vld [vmem:[%s282 + $0x9c] sm:$0xf]
        %v332 = vld [vmem:[%s282 + $0xa0] sm:$0xf]
        %v333 = vld [vmem:[%s282 + $0xa4] sm:$0xf]
        %v334 = vld [vmem:[%s282 + $0xa8] sm:$0xf]
        %v335 = vld [vmem:[%s282 + $0xac] sm:$0xf]
        %v336 = vld [vmem:[%s282 + $0xb0] sm:$0xf]
        %v337 = vld [vmem:[%s282 + $0xb4] sm:$0xf]
        %v338 = vld [vmem:[%s282 + $0xb8] sm:$0xf]
        %v339 = vld [vmem:[%s282 + $0xbc] sm:$0xf]
        %v340 = vld [vmem:[%s282 + $0xc0] sm:$0xf]
        %v341 = vld [vmem:[%s282 + $0xc4] sm:$0xf]
        %v342 = vld [vmem:[%s282 + $0xc8] sm:$0xf]
        %v343 = vld [vmem:[%s282 + $0xcc] sm:$0xf]
        %v344 = vld [vmem:[%s282 + $0xd0] sm:$0xf]
        %v345 = vld [vmem:[%s282 + $0xd4] sm:$0xf]
        %v346 = vld [vmem:[%s282 + $0xd8] sm:$0xf]
        %v347 = vld [vmem:[%s282 + $0xdc] sm:$0xf]
        %v348 = vld [vmem:[%s282 + $0xe0] sm:$0xf]
        %v349 = vld [vmem:[%s282 + $0xe4] sm:$0xf]
        %v350 = vld [vmem:[%s282 + $0xe8] sm:$0xf]
        %v351 = vld [vmem:[%s282 + $0xec] sm:$0xf]
        %v352 = vld [vmem:[%s282 + $0xf0] sm:$0xf]
        %v353 = vld [vmem:[%s282 + $0xf4] sm:$0xf]
        %v354 = vld [vmem:[%s282 + $0xf8] sm:$0xf]
        %v355 = vld [vmem:[%s282 + $0xfc] sm:$0xf]
        %v356 = vld [vmem:[#allocation2] sm:$0x3]
        %v357 = vld [vmem:[%s270] sm:$0xff]
        %v359 = vcombine.high %v357, %v357
        %v361 = vunpack.c.l.s4 1983009808
        %v362 = vunpack.c.0.s8 %v361
        %v363 = vlaneseq
        %v364 = vshrl.u32 %v363, 7
        %v365 = vsub.s32 %v362, %v364
        %v366 = vrot.slane %v357, %v365
        %v368 = vunpack.c.l.s4 1983009808
        %v369 = vunpack.c.0.s8 %v368
        %v370 = vlaneseq
        %v371 = vshrl.u32 %v370, 7
        %v372 = vsub.s32 %v369, %v371
        %v373 = vrot.slane %v359, %v372
        %v374 = vcombine.high %v366, %v366
        %v375 = vcombine.high %v373, %v373
        %v380 = vpack.c.bf16 %v366, %v366
        %v381 = vpack.c.bf16 %v374, %v374
        %v382 = vpack.c.bf16 %v373, %v373
        %v383 = vpack.c.bf16 %v375, %v375
        %v448 = vunpack.c.l.b16 %v292
        %v449 = vunpack.c.l.b16 %v293
        %v450 = vunpack.c.l.b16 %v294
        %v451 = vunpack.c.l.b16 %v295
        %v452 = vunpack.c.l.b16 %v296
        %v453 = vunpack.c.l.b16 %v297
        %v454 = vunpack.c.l.b16 %v298
        %v455 = vunpack.c.l.b16 %v299
        %v456 = vunpack.c.l.b16 %v300
        %v457 = vunpack.c.l.b16 %v301
        %v458 = vunpack.c.l.b16 %v302
        %v459 = vunpack.c.l.b16 %v303
        %v460 = vunpack.c.l.b16 %v304
        %v461 = vunpack.c.l.b16 %v305
        %v462 = vunpack.c.l.b16 %v306
        %v463 = vunpack.c.l.b16 %v307
        %v464 = vunpack.c.l.b16 %v308
        %v465 = vunpack.c.l.b16 %v309
        %v466 = vunpack.c.l.b16 %v310
        %v467 = vunpack.c.l.b16 %v311
        %v468 = vunpack.c.l.b16 %v312
        %v469 = vunpack.c.l.b16 %v313
        %v470 = vunpack.c.l.b16 %v314
        %v471 = vunpack.c.l.b16 %v315
        %v472 = vunpack.c.l.b16 %v316
        %v473 = vunpack.c.l.b16 %v317
        %v474 = vunpack.c.l.b16 %v318
        %v475 = vunpack.c.l.b16 %v319
        %v476 = vunpack.c.l.b16 %v320
        %v477 = vunpack.c.l.b16 %v321
        %v478 = vunpack.c.l.b16 %v322
        %v479 = vunpack.c.l.b16 %v323
        %v480 = vunpack.c.l.b16 %v324
        %v481 = vunpack.c.l.b16 %v325
        %v482 = vunpack.c.l.b16 %v326
        %v483 = vunpack.c.l.b16 %v327
        %v484 = vunpack.c.l.b16 %v328
        %v485 = vunpack.c.l.b16 %v329
        %v486 = vunpack.c.l.b16 %v330
        %v487 = vunpack.c.l.b16 %v331
        %v488 = vunpack.c.l.b16 %v332
        %v489 = vunpack.c.l.b16 %v333
        %v490 = vunpack.c.l.b16 %v334
        %v491 = vunpack.c.l.b16 %v335
        %v492 = vunpack.c.l.b16 %v336
        %v493 = vunpack.c.l.b16 %v337
        %v494 = vunpack.c.l.b16 %v338
        %v495 = vunpack.c.l.b16 %v339
        %v496 = vunpack.c.l.b16 %v340
        %v497 = vunpack.c.l.b16 %v341
        %v498 = vunpack.c.l.b16 %v342
        %v499 = vunpack.c.l.b16 %v343
        %v500 = vunpack.c.l.b16 %v344
        %v501 = vunpack.c.l.b16 %v345
        %v502 = vunpack.c.l.b16 %v346
        %v503 = vunpack.c.l.b16 %v347
        %v504 = vunpack.c.l.b16 %v348
        %v505 = vunpack.c.l.b16 %v349
        %v506 = vunpack.c.l.b16 %v350
        %v507 = vunpack.c.l.b16 %v351
        %v508 = vunpack.c.l.b16 %v352
        %v509 = vunpack.c.l.b16 %v353
        %v510 = vunpack.c.l.b16 %v354
        %v511 = vunpack.c.l.b16 %v355
        %v512 = vpack.c.b16 %v449, %v448
        %v513 = vpack.c.b16 %v451, %v450
        %v514 = vpack.c.b16 %v453, %v452
        %v515 = vpack.c.b16 %v455, %v454
        %v516 = vpack.c.b16 %v457, %v456
        %v517 = vpack.c.b16 %v459, %v458
        %v518 = vpack.c.b16 %v461, %v460
        %v519 = vpack.c.b16 %v463, %v462
        %v520 = vpack.c.b16 %v465, %v464
        %v521 = vpack.c.b16 %v467, %v466
        %v522 = vpack.c.b16 %v469, %v468
        %v523 = vpack.c.b16 %v471, %v470
        %v524 = vpack.c.b16 %v473, %v472
        %v525 = vpack.c.b16 %v475, %v474
        %v526 = vpack.c.b16 %v477, %v476
        %v527 = vpack.c.b16 %v479, %v478
        %v528 = vpack.c.b16 %v481, %v480
        %v529 = vpack.c.b16 %v483, %v482
        %v530 = vpack.c.b16 %v485, %v484
        %v531 = vpack.c.b16 %v487, %v486
        %v532 = vpack.c.b16 %v489, %v488
        %v533 = vpack.c.b16 %v491, %v490
        %v534 = vpack.c.b16 %v493, %v492
        %v535 = vpack.c.b16 %v495, %v494
        %v536 = vpack.c.b16 %v497, %v496
        %v537 = vpack.c.b16 %v499, %v498
        %v538 = vpack.c.b16 %v501, %v500
        %v539 = vpack.c.b16 %v503, %v502
        %v540 = vpack.c.b16 %v505, %v504
        %v541 = vpack.c.b16 %v507, %v506
        %v542 = vpack.c.b16 %v509, %v508
        %v543 = vpack.c.b16 %v511, %v510
        %576 = vmatprep.subr.bf16.mxu0 0
        %577 = vmatpush1.bf16.msra.mxu0 %v512
        %578 = vmatprep.subr.bf16.mxu0 0
        %579 = vmatpush1.bf16.msra.mxu0 %v513
        %580 = vmatprep.subr.bf16.mxu0 0
        %581 = vmatpush1.bf16.msra.mxu0 %v514
        %582 = vmatprep.subr.bf16.mxu0 0
        %583 = vmatpush1.bf16.msra.mxu0 %v515
        %584 = vmatprep.subr.bf16.mxu0 0
        %585 = vmatpush1.bf16.msra.mxu0 %v516
        %586 = vmatprep.subr.bf16.mxu0 0
        %587 = vmatpush1.bf16.msra.mxu0 %v517
        %588 = vmatprep.subr.bf16.mxu0 0
        %589 = vmatpush1.bf16.msra.mxu0 %v518
        %590 = vmatprep.subr.bf16.mxu0 0
        %591 = vmatpush1.bf16.msra.mxu0 %v519
        %592 = vmatprep.subr.bf16.mxu0 0
        %593 = vmatpush1.bf16.msra.mxu0 %v520
        %594 = vmatprep.subr.bf16.mxu0 0
        %595 = vmatpush1.bf16.msra.mxu0 %v521
        %596 = vmatprep.subr.bf16.mxu0 0
        %597 = vmatpush1.bf16.msra.mxu0 %v522
        %598 = vmatprep.subr.bf16.mxu0 0
        %599 = vmatpush1.bf16.msra.mxu0 %v523
        %600 = vmatprep.subr.bf16.mxu0 0
        %601 = vmatpush1.bf16.msra.mxu0 %v524
        %602 = vmatprep.subr.bf16.mxu0 0
        %603 = vmatpush1.bf16.msra.mxu0 %v525
        %604 = vmatprep.subr.bf16.mxu0 0
        %605 = vmatpush1.bf16.msra.mxu0 %v526
        %606 = vmatprep.subr.bf16.mxu0 0
        %607 = vmatpush1.bf16.msra.mxu0 %v527
        %608 = vmatprep.mubr.bf16.mxu0 %v381
        %609 = vmatmul.mubr.bf16.gmra.mrb[0].mxu0 %v380
        %v610 = vpop.f32.mrb[0].mxu0
        %v611 = vadd.f32 0.0, %v610
        %v612 = vpop.f32.mrb[0].mxu0
        %v613 = vpop.f32.mrb[0].mxu0
        %v614 = vpop.f32.mrb[0].mxu0
        %615 = vdwg.mxu0
        %616 = vmatprep.subr.bf16.mxu0 0
        %617 = vmatpush1.bf16.msra.mxu0 %v528
        %618 = vmatprep.subr.bf16.mxu0 0
        %619 = vmatpush1.bf16.msra.mxu0 %v529
        %620 = vmatprep.subr.bf16.mxu0 0
        %621 = vmatpush1.bf16.msra.mxu0 %v530
        %622 = vmatprep.subr.bf16.mxu0 0
        %623 = vmatpush1.bf16.msra.mxu0 %v531
        %624 = vmatprep.subr.bf16.mxu0 0
        %625 = vmatpush1.bf16.msra.mxu0 %v532
        %626 = vmatprep.subr.bf16.mxu0 0
        %627 = vmatpush1.bf16.msra.mxu0 %v533
        %628 = vmatprep.subr.bf16.mxu0 0
        %629 = vmatpush1.bf16.msra.mxu0 %v534
        %630 = vmatprep.subr.bf16.mxu0 0
        %631 = vmatpush1.bf16.msra.mxu0 %v535
        %632 = vmatprep.subr.bf16.mxu0 0
        %633 = vmatpush1.bf16.msra.mxu0 %v536
        %634 = vmatprep.subr.bf16.mxu0 0
        %635 = vmatpush1.bf16.msra.mxu0 %v537
        %636 = vmatprep.subr.bf16.mxu0 0
        %637 = vmatpush1.bf16.msra.mxu0 %v538
        %638 = vmatprep.subr.bf16.mxu0 0
        %639 = vmatpush1.bf16.msra.mxu0 %v539
        %640 = vmatprep.subr.bf16.mxu0 0
        %641 = vmatpush1.bf16.msra.mxu0 %v540
        %642 = vmatprep.subr.bf16.mxu0 0
        %643 = vmatpush1.bf16.msra.mxu0 %v541
        %644 = vmatprep.subr.bf16.mxu0 0
        %645 = vmatpush1.bf16.msra.mxu0 %v542
        %646 = vmatprep.subr.bf16.mxu0 0
        %647 = vmatpush1.bf16.msra.mxu0 %v543
        %648 = vmatprep.mubr.bf16.mxu0 %v383
        %649 = vmatmul.mubr.bf16.gmra.mrb[0].mxu0 %v382
        %v650 = vpop.f32.mrb[0].mxu0
        %v651 = vadd.f32 %v611, %v650
        %v652 = vpop.f32.mrb[0].mxu0
        %v653 = vpop.f32.mrb[0].mxu0
        %v654 = vpop.f32.mrb[0].mxu0
        %655 = vdwg.mxu0
        %v656 = vadd.f32 %v356, %v651
        %vm657 = vcmask 517120
        %658 = vst.msk [vmem:[#allocation2] sm:$0x3] %vm657, %v656
        %v659 = vld [vmem:[#allocation3] sm:$0x3]
        %v660 = vld [vmem:[%s276] sm:$0xff]
        %v662 = vcombine.high %v660, %v660
        %v664 = vunpack.c.l.s4 1983009808
        %v665 = vunpack.c.0.s8 %v664
        %v666 = vlaneseq
        %v667 = vshrl.u32 %v666, 7
        %v668 = vsub.s32 %v665, %v667
        %v669 = vrot.slane %v660, %v668
        %v671 = vunpack.c.l.s4 1983009808
        %v672 = vunpack.c.0.s8 %v671
        %v673 = vlaneseq
        %v674 = vshrl.u32 %v673, 7
        %v675 = vsub.s32 %v672, %v674
        %v676 = vrot.slane %v662, %v675
        %v677 = vcombine.high %v669, %v669
        %v678 = vcombine.high %v676, %v676
        %v683 = vpack.c.bf16 %v669, %v669
        %v684 = vpack.c.bf16 %v677, %v677
        %v685 = vpack.c.bf16 %v676, %v676
        %v686 = vpack.c.bf16 %v678, %v678
        %687 = vmatprep.subr.bf16.mxu0 0
        %688 = vmatpush1.bf16.msra.mxu0 %v512
        %689 = vmatprep.subr.bf16.mxu0 0
        %690 = vmatpush1.bf16.msra.mxu0 %v513
        %691 = vmatprep.subr.bf16.mxu0 0
        %692 = vmatpush1.bf16.msra.mxu0 %v514
        %693 = vmatprep.subr.bf16.mxu0 0
        %694 = vmatpush1.bf16.msra.mxu0 %v515
        %695 = vmatprep.subr.bf16.mxu0 0
        %696 = vmatpush1.bf16.msra.mxu0 %v516
        %697 = vmatprep.subr.bf16.mxu0 0
        %698 = vmatpush1.bf16.msra.mxu0 %v517
        %699 = vmatprep.subr.bf16.mxu0 0
        %700 = vmatpush1.bf16.msra.mxu0 %v518
        %701 = vmatprep.subr.bf16.mxu0 0
        %702 = vmatpush1.bf16.msra.mxu0 %v519
        %703 = vmatprep.subr.bf16.mxu0 0
        %704 = vmatpush1.bf16.msra.mxu0 %v520
        %705 = vmatprep.subr.bf16.mxu0 0
        %706 = vmatpush1.bf16.msra.mxu0 %v521
        %707 = vmatprep.subr.bf16.mxu0 0
        %708 = vmatpush1.bf16.msra.mxu0 %v522
        %709 = vmatprep.subr.bf16.mxu0 0
        %710 = vmatpush1.bf16.msra.mxu0 %v523
        %711 = vmatprep.subr.bf16.mxu0 0
        %712 = vmatpush1.bf16.msra.mxu0 %v524
        %713 = vmatprep.subr.bf16.mxu0 0
        %714 = vmatpush1.bf16.msra.mxu0 %v525
        %715 = vmatprep.subr.bf16.mxu0 0
        %716 = vmatpush1.bf16.msra.mxu0 %v526
        %717 = vmatprep.subr.bf16.mxu0 0
        %718 = vmatpush1.bf16.msra.mxu0 %v527
        %719 = vmatprep.mubr.bf16.mxu0 %v684
        %720 = vmatmul.mubr.bf16.gmra.mrb[0].mxu0 %v683
        %v721 = vpop.f32.mrb[0].mxu0
        %v722 = vadd.f32 0.0, %v721
        %v723 = vpop.f32.mrb[0].mxu0
        %v724 = vpop.f32.mrb[0].mxu0
        %v725 = vpop.f32.mrb[0].mxu0
        %726 = vdwg.mxu0
        %727 = vmatprep.subr.bf16.mxu0 0
        %728 = vmatpush1.bf16.msra.mxu0 %v528
        %729 = vmatprep.subr.bf16.mxu0 0
        %730 = vmatpush1.bf16.msra.mxu0 %v529
        %731 = vmatprep.subr.bf16.mxu0 0
        %732 = vmatpush1.bf16.msra.mxu0 %v530
        %733 = vmatprep.subr.bf16.mxu0 0
        %734 = vmatpush1.bf16.msra.mxu0 %v531
        %735 = vmatprep.subr.bf16.mxu0 0
        %736 = vmatpush1.bf16.msra.mxu0 %v532
        %737 = vmatprep.subr.bf16.mxu0 0
        %738 = vmatpush1.bf16.msra.mxu0 %v533
        %739 = vmatprep.subr.bf16.mxu0 0
        %740 = vmatpush1.bf16.msra.mxu0 %v534
        %741 = vmatprep.subr.bf16.mxu0 0
        %742 = vmatpush1.bf16.msra.mxu0 %v535
        %743 = vmatprep.subr.bf16.mxu0 0
        %744 = vmatpush1.bf16.msra.mxu0 %v536
        %745 = vmatprep.subr.bf16.mxu0 0
        %746 = vmatpush1.bf16.msra.mxu0 %v537
        %747 = vmatprep.subr.bf16.mxu0 0
        %748 = vmatpush1.bf16.msra.mxu0 %v538
        %749 = vmatprep.subr.bf16.mxu0 0
        %750 = vmatpush1.bf16.msra.mxu0 %v539
        %751 = vmatprep.subr.bf16.mxu0 0
        %752 = vmatpush1.bf16.msra.mxu0 %v540
        %753 = vmatprep.subr.bf16.mxu0 0
        %754 = vmatpush1.bf16.msra.mxu0 %v541
        %755 = vmatprep.subr.bf16.mxu0 0
        %756 = vmatpush1.bf16.msra.mxu0 %v542
        %757 = vmatprep.subr.bf16.mxu0 0
        %758 = vmatpush1.bf16.msra.mxu0 %v543
        %759 = vmatprep.mubr.bf16.mxu0 %v686
        %760 = vmatmul.mubr.bf16.gmra.mrb[0].mxu0 %v685
        %v761 = vpop.f32.mrb[0].mxu0
        %v762 = vadd.f32 %v722, %v761
        %v763 = vpop.f32.mrb[0].mxu0
        %v764 = vpop.f32.mrb[0].mxu0
        %v765 = vpop.f32.mrb[0].mxu0
        %766 = vdwg.mxu0
        %v767 = vadd.f32 %v659, %v762
        %768 = vst.msk [vmem:[#allocation3] sm:$0x3] %vm657, %v767
        %p769 = scmp.eq.s32.totalorder %s18, 1
        // Predicated region
        $region49: #{tpu_custom_call.1} parent=43 // pred_check
          %p770 = pneg %p769
        $region50: #{tpu_custom_call.1} parent=43 // pred_check_branch
          %772 = sbr.rel (%p770) target = $region52
        $region51: #{tpu_custom_call.1} parent=43 // pred_region
          %v773 = vld [vmem:[#allocation2] sm:$0x3]
          %v774 = vld [vmem:[%s3] sm:$0x1]
          %v776 = vlaneseq
          %v777 = vshrl.u32 %v776, 7
          %v778 = vsub.s32 0, %v777
          %v779 = vrot.slane %v774, %v778
          %v781 = vadd.f32 %v773, %v779
          %v782 = vmax.f32 %v781, 0.0
          %v783 = vld [vmem:[#allocation3] sm:$0x3]
          %v784 = vadd.f32 %v783, %v779
          %v785 = vmax.f32 %v784, 0.0
          %v786 = vlaneseq
          %v787 = vand.u32 %v786, 127
          %vm788 = vcmp.lt.s32.totalorder %v787, 32
          %v789 = vsel %vm788, %v782, %v785
          %v790 = vld [vmem:[%s4] sm:$0xff]
          %v791 = vld [vmem:[%s4 + $0x8] sm:$0xff]
          %v792 = vld [vmem:[%s4 + $0x10] sm:$0xff]
          %v793 = vld [vmem:[%s4 + $0x18] sm:$0xff]
          %v794 = vld [vmem:[%s4 + $0x20] sm:$0xff]
          %v795 = vld [vmem:[%s4 + $0x28] sm:$0xff]
          %v796 = vld [vmem:[%s4 + $0x30] sm:$0xff]
          %v797 = vld [vmem:[%s4 + $0x38] sm:$0xff]
          %v798 = vld [vmem:[%s5] sm:$0x1]
          %v800 = vlaneseq
          %v801 = vshrl.u32 %v800, 7
          %v802 = vsub.s32 0, %v801
          %v803 = vrot.slane %v798, %v802
          %vm805 = vcmask 523264
          %v807 = vsel %vm805, %v789, 0
          %809 = vmatprep.subr.mxu0 0.0
          %810 = vmatpush1.msra.mxu0 %v790
          %811 = vmatprep.subr.mxu0 0.0
          %812 = vmatpush1.msra.mxu0 %v791
          %813 = vmatprep.subr.mxu0 0.0
          %814 = vmatpush1.msra.mxu0 %v792
          %815 = vmatprep.subr.mxu0 0.0
          %816 = vmatpush1.msra.mxu0 %v793
          %817 = vmatprep.subr.mxu0 0.0
          %818 = vmatpush1.msra.mxu0 %v794
          %819 = vmatprep.subr.mxu0 0.0
          %820 = vmatpush1.msra.mxu0 %v795
          %821 = vmatprep.subr.mxu0 0.0
          %822 = vmatpush1.msra.mxu0 %v796
          %823 = vmatprep.subr.mxu0 0.0
          %824 = vmatpush1.msra.mxu0 %v797
          %825 = vmatprep.subr.mxu0 0.0
          %826 = vmatpush1.msra.mxu0 0.0
          %827 = vmatprep.subr.mxu0 0.0
          %828 = vmatpush1.msra.mxu0 0.0
          %829 = vmatprep.subr.mxu0 0.0
          %830 = vmatpush1.msra.mxu0 0.0
          %831 = vmatprep.subr.mxu0 0.0
          %832 = vmatpush1.msra.mxu0 0.0
          %833 = vmatprep.subr.mxu0 0.0
          %834 = vmatpush1.msra.mxu0 0.0
          %835 = vmatprep.subr.mxu0 0.0
          %836 = vmatpush1.msra.mxu0 0.0
          %837 = vmatprep.subr.mxu0 0.0
          %838 = vmatpush1.msra.mxu0 0.0
          %839 = vmatprep.subr.mxu0 0.0
          %840 = vmatpush1.msra.mxu0 0.0
          %841 = vmatprep.subr.mxu0 0.0
          %842 = vmatpush1.msra.mxu0 0.0
          %843 = vmatprep.subr.mxu0 0.0
          %844 = vmatpush1.msra.mxu0 0.0
          %845 = vmatprep.subr.mxu0 0.0
          %846 = vmatpush1.msra.mxu0 0.0
          %847 = vmatprep.subr.mxu0 0.0
          %848 = vmatpush1.msra.mxu0 0.0
          %849 = vmatprep.subr.mxu0 0.0
          %850 = vmatpush1.msra.mxu0 0.0
          %851 = vmatprep.subr.mxu0 0.0
          %852 = vmatpush1.msra.mxu0 0.0
          %853 = vmatprep.subr.mxu0 0.0
          %854 = vmatpush1.msra.mxu0 0.0
          %855 = vmatprep.subr.mxu0 0.0
          %856 = vmatpush1.msra.mxu0 0.0
          %857 = vmatprep.subr.mxu0 0.0
          %858 = vmatpush1.msra.mxu0 0.0
          %859 = vmatprep.subr.mxu0 0.0
          %860 = vmatpush1.msra.mxu0 0.0
          %861 = vmatprep.subr.mxu0 0.0
          %862 = vmatpush1.msra.mxu0 0.0
          %863 = vmatprep.subr.mxu0 0.0
          %864 = vmatpush1.msra.mxu0 0.0
          %865 = vmatprep.subr.mxu0 0.0
          %866 = vmatpush1.msra.mxu0 0.0
          %867 = vmatprep.subr.mxu0 0.0
          %868 = vmatpush1.msra.mxu0 0.0
          %869 = vmatprep.subr.mxu0 0.0
          %870 = vmatpush1.msra.mxu0 0.0
          %871 = vmatprep.subr.mxu0 0.0
          %872 = vmatpush1.msra.mxu0 0.0
          %873 = vmatprep.mubr.f32.mxu0 0.0
          %874 = vmatmul.mubr.f32.gmra.mrb[0].mxu0 %v807
          %v875 = vpop.f32.mrb[0].mxu0
          %v876 = vadd.f32 %v803, %v875
          %v877 = vpop.f32.mrb[0].mxu0
          %878 = vdwg.mxu0
          %vm879 = vcmask 9216
          %880 = vst.msk [vmem:[#allocation4] sm:$0x3] %vm879, %v876
        $region52: #{tpu_custom_call.1} parent=43 // pred_fallthru
          _
        // Predicated region
        $region53: #{tpu_custom_call.1} parent=43 // pred_check
          %p881 = pneg %p172
        $region54: #{tpu_custom_call.1} parent=43 // pred_check_branch
          %883 = sbr.rel (%p881) target = $region56
        $region55: #{tpu_custom_call.1} parent=43 // pred_region
          %s885 = ssub.s32 32, 32
          %886 = vsyncadd [#allocation5], %s885
          %s888 = sshll.u32 [#allocation4], 4
          %s889 = int_to_ptr.vmem [resolvable:$true] %s888
          %891 = dma.vmem_to_hbm [thread:$0]  %s889, 32, %s6, [#allocation5]
        $region56: #{tpu_custom_call.1} parent=43 // pred_fallthru
          _
        // Predicated region
        $region57: #{tpu_custom_call.1} parent=43 // pred_check
          %p892 = pneg %p172
        $region58: #{tpu_custom_call.1} parent=43 // pred_check_branch
          %894 = sbr.rel (%p892) target = $region60
        $region59: #{tpu_custom_call.1} parent=43 // pred_region
          %895 = dma.done [#allocation5], 32
        $region60: #{tpu_custom_call.1} parent=43 // pred_fallthru
          _
      $region44: #{tpu_custom_call.1} parent=5 // pred_fallthru
        _
      %p896 = scmp.le.s32.totalorder 2, %s13
      // Predicated region
      $region61: #{tpu_custom_call.1} parent=5 // pred_check
        %p897 = pneg %p896
      $region62: #{tpu_custom_call.1} parent=5 // pred_check_branch
        %899 = sbr.rel (%p897) target = $region64
      $region63: #{tpu_custom_call.1} parent=5 // pred_region
        %s900 = ssub.s32 %s13, 2
      $region64: #{tpu_custom_call.1} parent=5 // pred_fallthru
        _
    $region6: #{tpu_custom_call.1} parent=1 // loop_footer
      %s17 = sadd.s32 1, %s13
    $region7: #{tpu_custom_call.1} parent=1 // loop_footer_branch
      %12 = sbr.rel target = $region3
    $region8: #{tpu_custom_call.1} parent=1 // loop_exit
      _
    %901 = vsyncpa [#allocation5], 1
    %s902 = scalar_lea.sflag [#allocation5], 1
    %903 = vsyncpa %s902, 1

</llo_original>
